<compile_context>
chip_gen: v5e
topology: v5e:2x2
jax: 0.10.0
libtpu: 0.0.40
codegen_flags: <defaults>
</compile_context>

<pallas_src>
import math
import functools

import jax
import jax.numpy as jnp
from jax import lax
from jax.experimental import pallas as pl
from jax.experimental.pallas import tpu as pltpu


_MASK_VALUE = -0.7 * float(jnp.finfo(jnp.float32).max)


def _round_up(x, m):
    return ((x + m - 1) // m) * m


def _fit(dim, target, quantum=128):
    """Largest tile <= target dividing dim, preferring multiples of `quantum`.

    Used only for static model dims (K / N of the projections); the variable
    dims (M = B*T, sequence T) are padded instead of falling back to full dim.
    """
    t = min(target, dim)
    if t >= quantum:
        t = (t // quantum) * quantum
        while t > quantum and dim % t:
            t -= quantum
    return t if dim % t == 0 else dim


@functools.lru_cache(maxsize=1)
def _vmem_limit_bytes():
    """Generation-aware VMEM limit: ~60% of physical VMEM, capped at 48 MiB."""
    cap = 128 * 1024 * 1024
    try:
        cap = int(getattr(pltpu.get_tpu_info(), "vmem_capacity_bytes", cap)) or cap
    except Exception:
        pass
    return min(48 * 1024 * 1024, (cap * 3) // 5)


# ----------------------------------------------------------------------------
# Tiled linear: y = x @ W + b   (bf16 operands, f32 accumulation)
# ----------------------------------------------------------------------------
def _linear_kernel(x_ref, w_ref, b_ref, o_ref, acc_ref):
    k = pl.program_id(2)

    @pl.when(k == 0)
    def _init():
        acc_ref[...] = jnp.zeros_like(acc_ref)

    acc_ref[...] += jnp.dot(x_ref[...], w_ref[...],
                            preferred_element_type=jnp.float32)

    @pl.when(k == pl.num_programs(2) - 1)
    def _finalize():
        o_ref[...] = (acc_ref[...] + b_ref[...]).astype(o_ref.dtype)


def _linear(x2d, w, b, *, out_dtype=None, tm=512, tn=512, tk=512):
    M, K = x2d.shape
    _, N = w.shape
    out_dtype = out_dtype or x2d.dtype

    tn = _fit(N, tn)
    tk = _fit(K, tk)
    tm = min(tm, _round_up(M, 8))
    Mp = _round_up(M, tm)
    if Mp != M:
        x2d = jnp.pad(x2d, ((0, Mp - M), (0, 0)))

    in_bytes = int(x2d.dtype.itemsize)
    out_bytes = int(jnp.dtype(out_dtype).itemsize)
    cost = pl.CostEstimate(
        flops=int(2 * Mp * N * K),
        transcendentals=0,
        bytes_accessed=int((Mp * K * (N // tn) + K * N * (Mp // tm)) * in_bytes
                           + (N + Mp * N) * out_bytes))

    out = pl.pallas_call(
        _linear_kernel,
        out_shape=jax.ShapeDtypeStruct((Mp, N), out_dtype),
        grid_spec=pltpu.PrefetchScalarGridSpec(
            num_scalar_prefetch=0,
            grid=(Mp // tm, N // tn, K // tk),
            in_specs=[
                pl.BlockSpec((tm, tk), lambda i, j, k: (i, k)),
                pl.BlockSpec((tk, tn), lambda i, j, k: (k, j)),
                pl.BlockSpec((1, tn), lambda i, j, k: (0, j)),
            ],
            out_specs=pl.BlockSpec((tm, tn), lambda i, j, k: (i, j)),
            scratch_shapes=[pltpu.VMEM((tm, tn), jnp.float32)],
        ),
        compiler_params=pltpu.CompilerParams(
            dimension_semantics=("parallel", "parallel", "arbitrary"),
            vmem_limit_bytes=_vmem_limit_bytes()),
        cost_estimate=cost,
    )(x2d, w, b.astype(jnp.float32).reshape(1, N))

    return out[:M] if Mp != M else out


# ----------------------------------------------------------------------------
# Causal flash attention.  Grid = (B, H, lower-triangular block pairs), with
# the (qi, ki) pair tables scalar-prefetched into SMEM so fully-masked blocks
# cost neither a K/V DMA nor a grid step.
# ----------------------------------------------------------------------------
def _flash_kernel(qi_ref, ki_ref, q_ref, k_ref, v_ref, o_ref,
                  m_sc, l_sc, acc_sc, *, tq, tkv, num_kv, scale):
    p = pl.program_id(2)
    qi = qi_ref[p]
    ki = ki_ref[p]

    @pl.when(ki == 0)
    def _init():
        m_sc[...] = jnp.full_like(m_sc, _MASK_VALUE)
        l_sc[...] = jnp.zeros_like(l_sc)
        acc_sc[...] = jnp.zeros_like(acc_sc)

    def _accumulate(apply_mask):
        # Fold 1/sqrt(hd) into q: (tq, hd) VALU op instead of (tq, tkv).
        q = q_ref[...] * scale
        # q @ k^T via transposed contraction -- no XLU transpose of k.
        s = lax.dot_general(q, k_ref[...], (((1,), (1,)), ((), ())),
                            preferred_element_type=jnp.float32)       # (tq, tkv)
        if apply_mask:  # only diagonal-touching blocks pay for the mask
            row = qi * tq + lax.broadcasted_iota(jnp.int32, (tq, tkv), 0)
            col = ki * tkv + lax.broadcasted_iota(jnp.int32, (tq, tkv), 1)
            s = jnp.where(col <= row, s, _MASK_VALUE)

        m_prev = m_sc[...]                                             # (tq, 1)
        m_new = jnp.maximum(m_prev, s.max(axis=-1, keepdims=True))
        alpha = jnp.exp(m_prev - m_new)
        prob = jnp.exp(s - m_new)                                      # f32
        l_sc[...] = alpha * l_sc[...] + prob.sum(axis=-1, keepdims=True)
        acc_sc[...] = alpha * acc_sc[...] + jnp.dot(
            prob.astype(v_ref.dtype), v_ref[...],
            preferred_element_type=jnp.float32)
        m_sc[...] = m_new

    # A block needs masking iff its max column index exceeds its min row index.
    needs_mask = ki * tkv + (tkv - 1) > qi * tq

    @pl.when(needs_mask)
    def _masked():
        _accumulate(True)

    @pl.when(jnp.logical_not(needs_mask))
    def _unmasked():
        _accumulate(False)

    # Last kv block visited for this q block (the pair table stops there).
    last_ki = jnp.minimum((qi * tq + tq - 1) // tkv, num_kv - 1)

    @pl.when(ki == last_ki)
    def _finalize():
        inv_l = pl.reciprocal(l_sc[...], approx=True)                  # EUP slot
        o_ref[...] = (acc_sc[...] * inv_l).astype(o_ref.dtype)


def _flash_attention(q, k, v, *, block_q=256, block_kv=256):
    B, H, T, hd = q.shape
    assert block_q % 8 == 0 and block_kv % 8 == 0

    tq = min(block_q, _round_up(T, 8))
    tkv = min(block_kv, _round_up(T, 8))
    Tq, Tk = _round_up(T, tq), _round_up(T, tkv)
    if Tq != T:
        q = jnp.pad(q, ((0, 0), (0, 0), (0, Tq - T), (0, 0)))
    if Tk != T:
        k = jnp.pad(k, ((0, 0), (0, 0), (0, Tk - T), (0, 0)))
        v = jnp.pad(v, ((0, 0), (0, 0), (0, Tk - T), (0, 0)))
    num_q, num_kv = Tq // tq, Tk // tkv
    scale = 1.0 / math.sqrt(hd)

    # Enumerate only lower-triangular (q_block, kv_block) pairs (static).
    qi_list, ki_list = [], []
    for qi in range(num_q):
        last = min((qi * tq + tq - 1) // tkv, num_kv - 1)
        for ki in range(last + 1):
            qi_list.append(qi)
            ki_list.append(ki)
    n_pairs = len(qi_list)
    qi_tab = jnp.asarray(qi_list, dtype=jnp.int32)
    ki_tab = jnp.asarray(ki_list, dtype=jnp.int32)

    itemsize = int(q.dtype.itemsize)
    cost = pl.CostEstimate(
        flops=int(4 * B * H * n_pairs * tq * tkv * hd),          # causal-skipped
        transcendentals=int(B * H * n_pairs * tq * tkv),
        bytes_accessed=int(B * H * hd * itemsize
                           * (2 * num_q * tq + 2 * n_pairs * tkv)))

    kernel = functools.partial(_flash_kernel, tq=tq, tkv=tkv,
                               num_kv=num_kv, scale=scale)

    out = pl.pallas_call(
        kernel,
        out_shape=jax.ShapeDtypeStruct((B, H, Tq, hd), q.dtype),
        grid_spec=pltpu.PrefetchScalarGridSpec(
            num_scalar_prefetch=2,
            grid=(B, H, n_pairs),
            in_specs=[
                pl.BlockSpec((None, None, tq, hd),
                             lambda b, h, p, qt, kt: (b, h, qt[p], 0)),
                pl.BlockSpec((None, None, tkv, hd),
                             lambda b, h, p, qt, kt: (b, h, kt[p], 0)),
                pl.BlockSpec((None, None, tkv, hd),
                             lambda b, h, p, qt, kt: (b, h, kt[p], 0)),
            ],
            out_specs=pl.BlockSpec((None, None, tq, hd),
                                   lambda b, h, p, qt, kt: (b, h, qt[p], 0)),
            scratch_shapes=[
                pltpu.VMEM((tq, 1), jnp.float32),    # running row max
                pltpu.VMEM((tq, 1), jnp.float32),    # running softmax denom
                pltpu.VMEM((tq, hd), jnp.float32),   # output accumulator
            ],
        ),
        compiler_params=pltpu.CompilerParams(
            dimension_semantics=("parallel", "parallel", "arbitrary"),
            vmem_limit_bytes=_vmem_limit_bytes()),
        cost_estimate=cost,
    )(qi_tab, ki_tab, q, k, v)

    return out[:, :, :T, :] if Tq != T else out


# ----------------------------------------------------------------------------
# Full module forward
# ----------------------------------------------------------------------------
def causal_self_attention(x, w_qkv, b_qkv, w_proj, b_proj, *, n_head,
                          block_q=256, block_kv=256,
                          compute_dtype=jnp.bfloat16):
    """x: (B, T, C); w_qkv: (C, 3C); b_qkv: (3C,); w_proj: (C, C); b_proj: (C,)."""
    B, T, C = x.shape
    assert C % n_head == 0
    hd = C // n_head
    out_dtype = x.dtype

    # 1) Fused QKV projection (bf16 MXU, f32 accumulation, bf16 out).
    qkv = _linear(x.astype(compute_dtype).reshape(B * T, C),
                  w_qkv.astype(compute_dtype), b_qkv,
                  out_dtype=compute_dtype)                        # (B*T, 3C)

    # 2) Split into Q/K/V shaped (B, H, T, hd) -- layout passes done by XLA.
    # TODO(synk): fuse this head split / the step-4 merge into the projection
    #             kernels' index maps to save the extra HBM passes.
    qkv = qkv.reshape(B, T, 3, n_head, hd)
    q = qkv[:, :, 0].transpose(0, 2, 1, 3)
    k = qkv[:, :, 1].transpose(0, 2, 1, 3)
    v = qkv[:, :, 2].transpose(0, 2, 1, 3)

    # 3) Causal flash attention (online softmax, lower-triangular block grid).
    y = _flash_attention(q, k, v, block_q=block_q, block_kv=block_kv)

    # 4) Merge heads and output projection.
    y = y.transpose(0, 2, 1, 3).reshape(B * T, C)
    out = _linear(y, w_proj.astype(compute_dtype), b_proj, out_dtype=out_dtype)
    return out.reshape(B, T, C)


# ----------------------------------------------------------------------------
# Pure-JAX reference (mirrors the PyTorch module, f32)
# ----------------------------------------------------------------------------
def _reference(x, w_qkv, b_qkv, w_proj, b_proj, n_head):
    B, T, C = x.shape
    hd = C // n_head
    qkv = x @ w_qkv + b_qkv
    q, k, v = jnp.split(qkv, 3, axis=-1)
    q = q.reshape(B, T, n_head, hd).transpose(0, 2, 1, 3)
    k = k.reshape(B, T, n_head, hd).transpose(0, 2, 1, 3)
    v = v.reshape(B, T, n_head, hd).transpose(0, 2, 1, 3)
    att = jnp.einsum("bhqd,bhkd->bhqk", q, k) / math.sqrt(hd)
    mask = jnp.tril(jnp.ones((T, T), dtype=bool))
    att = jnp.where(mask[None, None], att, -jnp.inf)
    att = jax.nn.softmax(att, axis=-1)
    y = jnp.einsum("bhqk,bhkd->bhqd", att, v)
    y = y.transpose(0, 2, 1, 3).reshape(B, T, C)
    return y @ w_proj + b_proj


if __name__ == "__main__":
    key = jax.random.PRNGKey(0)

    def make_params(pkey, C):
        k1, k2, k3, k4 = jax.random.split(pkey, 4)
        w_qkv = 0.02 * jax.random.normal(k1, (C, 3 * C), dtype=jnp.float32)
        b_qkv = 0.01 * jax.random.normal(k2, (3 * C,), dtype=jnp.float32)
        w_proj = 0.02 * jax.random.normal(k3, (C, C), dtype=jnp.float32)
        b_proj = 0.01 * jax.random.normal(k4, (C,), dtype=jnp.float32)
        return w_qkv, b_qkv, w_proj, b_proj

    # Case 1: tile-divisible shapes (B=2, T=16, C=32, 4 heads, hd=8).  Small
    # 8x8 flash tiles so the block-pair grid, masked/unmasked branches and
    # the online-softmax carry are all exercised even at this tiny size.
    B, T, C, n_head = 2, 16, 32, 4
    kx, kp = jax.random.split(key)
    x = jax.random.normal(kx, (B, T, C), dtype=jnp.float32)
    params = make_params(kp, C)
    out = causal_self_attention(x, *params, n_head=n_head,
                                block_q=8, block_kv=8)
    out = jax.block_until_ready(out)
    ref = _reference(x, *params, n_head)
    assert out.shape == (B, T, C)
    # Tolerance covers the bf16 operand path + approx reciprocal.
    assert jnp.allclose(out, ref, atol=1e-2, rtol=5e-2), (
        f"mismatch (divisible case), max abs err {jnp.max(jnp.abs(out - ref))}")

    # Case 2: non-tile-divisible T (exercises the zero-padding path).
    B2, T2, C2, n_head2 = 2, 13, 32, 2
    kx2, kp2 = jax.random.split(kp)
    x2 = jax.random.normal(kx2, (B2, T2, C2), dtype=jnp.float32)
    params2 = make_params(kp2, C2)
    out2 = causal_self_attention(x2, *params2, n_head=n_head2,
                                 block_q=8, block_kv=8)
    out2 = jax.block_until_ready(out2)
    ref2 = _reference(x2, *params2, n_head2)
    assert out2.shape == (B2, T2, C2)
    assert jnp.allclose(out2, ref2, atol=1e-2, rtol=5e-2), (
        f"mismatch (padded case), max abs err {jnp.max(jnp.abs(out2 - ref2))}")

    print("KERNEL_OK")
</pallas_src>

<mosaic_0001>
module attributes {stable_mosaic.version = 11 : i64} {
  func.func @_linear_kernel(%arg0: i32, %arg1: i32, %arg2: i32, %arg3: memref<32x32xbf16, #tpu.memory_space<vmem>>, %arg4: memref<32x96xbf16, #tpu.memory_space<vmem>>, %arg5: memref<1x96xf32, #tpu.memory_space<vmem>>, %arg6: memref<32x96xbf16, #tpu.memory_space<vmem>>, %arg7: memref<32x96xf32, #tpu.memory_space<vmem>>) attributes {dimension_semantics = [#tpu.dimension_semantics<parallel>, #tpu.dimension_semantics<parallel>, #tpu.dimension_semantics<arbitrary>], iteration_bounds = array<i64: 1, 1, 1>, scalar_prefetch = 0 : i64, scratch_operands = 1 : i64, tpu.core_type = #tpu.core_type<tc>, window_params = [{transform_indices = @transform_0, window_bounds = array<i64: 32, 32>}, {transform_indices = @transform_1, window_bounds = array<i64: 32, 96>}, {transform_indices = @transform_2, window_bounds = array<i64: 1, 96>}, {transform_indices = @transform_3, window_bounds = array<i64: 32, 96>}]} {
    %c0_i32 = arith.constant 0 : i32
    %0 = arith.cmpi eq, %arg2, %c0_i32 : i32
    %1 = arith.extui %0 : i1 to i32
    %c0_i32_0 = arith.constant 0 : i32
    %2 = arith.cmpi ne, %1, %c0_i32_0 : i32
    scf.if %2 {
      %cst_10 = arith.constant 0.000000e+00 : f32
      %12 = vector.broadcast %cst_10 : f32 to vector<32x96xf32>
      %c0_11 = arith.constant 0 : index
      %c0_12 = arith.constant 0 : index
      %13 = vector.load %arg7[%c0_11, %c0_12] : memref<32x96xf32, #tpu.memory_space<vmem>>, vector<32x96xf32>
      tpu.vector_store %arg7[%c0_11, %c0_12], %12 {strides = array<i32>} : memref<32x96xf32, #tpu.memory_space<vmem>>, vector<32x96xf32>,
    } else {
    }
    %c0 = arith.constant 0 : index
    %c0_1 = arith.constant 0 : index
    %3 = vector.load %arg7[%c0, %c0_1] : memref<32x96xf32, #tpu.memory_space<vmem>>, vector<32x96xf32>
    %c0_2 = arith.constant 0 : index
    %c0_3 = arith.constant 0 : index
    %4 = vector.load %arg3[%c0_2, %c0_3] : memref<32x32xbf16, #tpu.memory_space<vmem>>, vector<32x32xbf16>
    %c0_4 = arith.constant 0 : index
    %c0_5 = arith.constant 0 : index
    %5 = vector.load %arg4[%c0_4, %c0_5] : memref<32x96xbf16, #tpu.memory_space<vmem>>, vector<32x96xbf16>
    %cst = arith.constant dense<0.000000e+00> : vector<32x96xf32>
    %6 = tpu.matmul %4, %5, %cst {dimension_numbers = #tpu.dot_dimension_numbers<[1], [0], [0], [1], [0, 0, 1, 1], [], []>} : vector<32x32xbf16>, vector<32x96xbf16>, vector<32x96xf32> -> vector<32x96xf32>
    %7 = arith.addf %3, %6 : vector<32x96xf32>
    %c0_6 = arith.constant 0 : index
    %c0_7 = arith.constant 0 : index
    %8 = vector.load %arg7[%c0_6, %c0_7] : memref<32x96xf32, #tpu.memory_space<vmem>>, vector<32x96xf32>
    tpu.vector_store %arg7[%c0_6, %c0_7], %7 {strides = array<i32>} : memref<32x96xf32, #tpu.memory_space<vmem>>, vector<32x96xf32>,
    %c0_i32_8 = arith.constant 0 : i32
    %9 = arith.cmpi eq, %arg2, %c0_i32_8 : i32
    %10 = arith.extui %9 : i1 to i32
    %c0_i32_9 = arith.constant 0 : i32
    %11 = arith.cmpi ne, %10, %c0_i32_9 : i32
    scf.if %11 {
      %c0_10 = arith.constant 0 : index
      %c0_11 = arith.constant 0 : index
      %12 = vector.load %arg7[%c0_10, %c0_11] : memref<32x96xf32, #tpu.memory_space<vmem>>, vector<32x96xf32>
      %c0_12 = arith.constant 0 : index
      %c0_13 = arith.constant 0 : index
      %13 = vector.load %arg5[%c0_12, %c0_13] : memref<1x96xf32, #tpu.memory_space<vmem>>, vector<1x96xf32>
      %14 = vector.broadcast %13 : vector<1x96xf32> to vector<32x96xf32>
      %15 = arith.addf %12, %14 : vector<32x96xf32>
      %16 = arith.truncf %15 : vector<32x96xf32> to vector<32x96xbf16>
      %c0_14 = arith.constant 0 : index
      %c0_15 = arith.constant 0 : index
      %17 = vector.load %arg6[%c0_14, %c0_15] : memref<32x96xbf16, #tpu.memory_space<vmem>>, vector<32x96xbf16>
      tpu.vector_store %arg6[%c0_14, %c0_15], %16 {strides = array<i32>} : memref<32x96xbf16, #tpu.memory_space<vmem>>, vector<32x96xbf16>,
    } else {
    }
    return
  }
  func.func @transform_0(%arg0: i32, %arg1: i32, %arg2: i32) -> (i32, i32) {
    %c0_i32 = arith.constant 0 : i32
    return %arg0, %arg2 : i32, i32
  }
  func.func @transform_1(%arg0: i32, %arg1: i32, %arg2: i32) -> (i32, i32) {
    %c0_i32 = arith.constant 0 : i32
    return %arg2, %arg1 : i32, i32
  }
  func.func @transform_2(%arg0: i32, %arg1: i32, %arg2: i32) -> (i32, i32) {
    %c0_i32 = arith.constant 0 : i32
    %c0_i32_0 = arith.constant 0 : i32
    return %c0_i32, %arg1 : i32, i32
  }
  func.func @transform_3(%arg0: i32, %arg1: i32, %arg2: i32) -> (i32, i32) {
    %c0_i32 = arith.constant 0 : i32
    return %arg0, %arg1 : i32, i32
  }
}

</mosaic_0001>

<llo_original>
// kernel: tpu_custom_call.1
$region0: #{tpu_custom_call.1}
  #allocation0 [shape = 'u32[]', space=smem, size = 0x4, offset = 0x4, fixed_abs, tag = 'smem constant byte address 0x4 - core index']
  #allocation1 [shape = 'u32[72,128]{1,0:T(1,128)}', space=vmem, size = 0x9000, scoped, tag = 'internal scratch']
  #allocation2 [shape = 'f32[32,96]{1,0:T(8,128)}', space=vmem, size = 0x4000, scoped, tag = 'scratch operand']
  %s0 = inlined_call_operand.hbm [shape: bf16[32,32], index: 0, kind: input, shape index: {}]
  %s1 = inlined_call_operand.hbm [shape: bf16[32,96], index: 1, kind: input, shape index: {}]
  %s2 = inlined_call_operand.vmem [shape: f32[1,96], index: 2, kind: input, shape index: {}]
  %s3 = inlined_call_operand.hbm [shape: bf16[32,96], index: 3, kind: output, shape index: {}]
  %s4 = sld [smem:[#allocation0]]
  $region38: #{tpu_custom_call.1} parent=0
    _
  %s6 = ssub.s32 1, %s4
  %s7 = scalar_select 0, %s6, %s4
  $region1: #{tpu_custom_call.1} parent=0
    #allocation3 [shape = 'u8[8192]{0}', space=vmem, size = 0x2000, scoped, tag = 'input window, operand 0, single buffered']
    #allocation4 [shape = 's32[1]{0}', space=sflag, size = 0x4, scoped, tag = 'scoped memory for tpu_custom_call.1']
    #allocation5 [shape = 's32[1]{0}', space=sflag, size = 0x4, scoped, tag = 'scoped memory for tpu_custom_call.1']
    #allocation6 [shape = 'u8[8192]{0}', space=vmem, size = 0x2000, scoped, tag = 'input window, operand 1, single buffered']
    #allocation7 [shape = 's32[1]{0}', space=sflag, size = 0x4, scoped, tag = 'scoped memory for tpu_custom_call.1']
    #allocation8 [shape = 'u8[8192]{0}', space=vmem, size = 0x2000, scoped, tag = 'output window, operand 0, single buffered']
    %8 = vsyncpa [#allocation4], 0
    %9 = vsyncpa [#allocation7], 0
    %10 = vsyncpa [#allocation5], 0
    // Predicated region
    $region2: #{tpu_custom_call.1} parent=1 // pred_check
      _
    $region3: #{tpu_custom_call.1} parent=1 // pred_check_branch
      %12 = sbr.rel (0) target = $region5
    $region4: #{tpu_custom_call.1} parent=1 // pred_region
      %14 = vsyncadd [#allocation4], 0
      %s15 = sshll.u32 %s0, 4
      %s16 = int_to_ptr.hbm [resolvable:$true] %s15
      %s17 = sshll.u32 [#allocation3], 4
      %s18 = int_to_ptr.vmem [resolvable:$true] %s17
      %23 = dma.hbm_to_vmem [thread:$0]  %s16, 256, %s18, [#allocation4], 64, 64, 4
    $region5: #{tpu_custom_call.1} parent=1 // pred_fallthru
      _
    // Predicated region
    $region6: #{tpu_custom_call.1} parent=1 // pred_check
      _
    $region7: #{tpu_custom_call.1} parent=1 // pred_check_branch
      %25 = sbr.rel (0) target = $region9
    $region8: #{tpu_custom_call.1} parent=1 // pred_region
      %27 = vsyncadd [#allocation7], 0
      %s28 = sshll.u32 %s1, 4
      %s29 = int_to_ptr.hbm [resolvable:$true] %s28
      %s30 = sshll.u32 [#allocation6], 4
      %s31 = int_to_ptr.vmem [resolvable:$true] %s30
      %36 = dma.hbm_to_vmem [thread:$0]  %s29, 256, %s31, [#allocation7], 64, 64, 4
    $region9: #{tpu_custom_call.1} parent=1 // pred_fallthru
      _
    // Predicated region
    $region10: #{tpu_custom_call.1} parent=1 // pred_check
      _
    $region11: #{tpu_custom_call.1} parent=1 // pred_check_branch
      %38 = sbr.rel (0) target = $region13
    $region12: #{tpu_custom_call.1} parent=1 // pred_region
      _
    $region13: #{tpu_custom_call.1} parent=1 // pred_fallthru
      _
    // Predicated region
    $region14: #{tpu_custom_call.1} parent=1 // pred_check
      _
    $region15: #{tpu_custom_call.1} parent=1 // pred_check_branch
      %40 = sbr.rel (0) target = $region17
    $region16: #{tpu_custom_call.1} parent=1 // pred_region
      %42 = dma.done [#allocation4], 256
    $region17: #{tpu_custom_call.1} parent=1 // pred_fallthru
      _
    // Predicated region
    $region18: #{tpu_custom_call.1} parent=1 // pred_check
      _
    $region19: #{tpu_custom_call.1} parent=1 // pred_check_branch
      %44 = sbr.rel (0) target = $region21
    $region20: #{tpu_custom_call.1} parent=1 // pred_region
      %46 = dma.done [#allocation7], 256
    $region21: #{tpu_custom_call.1} parent=1 // pred_fallthru
      _
    %p48 = scmp.eq.s32.totalorder 0, 0
    // Predicated region
    $region22: #{tpu_custom_call.1} parent=1 // pred_check
      %p49 = pneg %p48
    $region23: #{tpu_custom_call.1} parent=1 // pred_check_branch
      %51 = sbr.rel (%p49) target = $region25
    $region24: #{tpu_custom_call.1} parent=1 // pred_region
      %vm52 = vcmask 785408
      %53 = vst.msk [vmem:[#allocation2] sm:$0xff] %vm52, 0.0
      %54 = vst.msk [vmem:[#allocation2 + $0x8] sm:$0xff] %vm52, 0.0
      %55 = vst.msk [vmem:[#allocation2 + $0x10] sm:$0xff] %vm52, 0.0
      %56 = vst.msk [vmem:[#allocation2 + $0x18] sm:$0xff] %vm52, 0.0
    $region25: #{tpu_custom_call.1} parent=1 // pred_fallthru
      _
    %v57 = vld [vmem:[#allocation2] sm:$0xff]
    %v58 = vld [vmem:[#allocation2 + $0x8] sm:$0xff]
    %v59 = vld [vmem:[#allocation2 + $0x10] sm:$0xff]
    %v60 = vld [vmem:[#allocation2 + $0x18] sm:$0xff]
    %v61 = vld [vmem:[#allocation3] sm:$0xf]
    %v62 = vld [vmem:[#allocation3 + $0x4] sm:$0xf]
    %v63 = vld [vmem:[#allocation3 + $0x8] sm:$0xf]
    %v64 = vld [vmem:[#allocation3 + $0xc] sm:$0xf]
    %v65 = vld [vmem:[#allocation6] sm:$0xf]
    %v66 = vld [vmem:[#allocation6 + $0x4] sm:$0xf]
    %v67 = vld [vmem:[#allocation6 + $0x8] sm:$0xf]
    %v68 = vld [vmem:[#allocation6 + $0xc] sm:$0xf]
    %v73 = vunpack.c.l.b16 %v61
    %v74 = vunpack.c.l.b16 %v62
    %v75 = vunpack.c.l.b16 %v63
    %v76 = vunpack.c.l.b16 %v64
    %v77 = vpack.c.b16 %v74, %v73
    %v78 = vpack.c.b16 %v76, %v75
    %v83 = vunpack.c.l.b16 %v65
    %v84 = vunpack.c.l.b16 %v66
    %v85 = vunpack.c.l.b16 %v67
    %v86 = vunpack.c.l.b16 %v68
    %v87 = vpack.c.b16 %v84, %v83
    %v88 = vpack.c.b16 %v86, %v85
    %vm91 = vcmask 261120
    %v93 = vsel %vm91, %v77, 0
    %v96 = vsel %vm91, %v78, 0
    %98 = vmatpush.bf16.msra.mxu0 0
    %99 = vmatpush.bf16.msra.mxu0 0
    %100 = vmatpush.bf16.msra.mxu0 0
    %101 = vmatpush.bf16.msra.mxu0 0
    %102 = vmatpush.bf16.msra.mxu0 0
    %103 = vmatpush.bf16.msra.mxu0 0
    %104 = vmatpush.bf16.msra.mxu0 %v88
    %105 = vmatpush.bf16.msra.mxu0 %v87
    %106 = vmatmul.bf16.gmra.mxu0 %v93
    %v107 = vpop.f32.mrf.mxu0
    %v108 = vadd.f32 0.0, %v107
    %v109 = vpop.f32.mrf.mxu0
    %v110 = vadd.f32 0.0, %v109
    %111 = vmatmul.bf16.gmra.mxu0 %v96
    %v112 = vpop.f32.mrf.mxu0
    %v113 = vadd.f32 0.0, %v112
    %v114 = vpop.f32.mrf.mxu0
    %v115 = vadd.f32 0.0, %v114
    %116 = vdwg.mxu0
    %v117 = vadd.f32 %v57, %v108
    %v118 = vadd.f32 %v58, %v110
    %v119 = vadd.f32 %v59, %v113
    %v120 = vadd.f32 %v60, %v115
    %vm121 = vcmask 785408
    %122 = vst.msk [vmem:[#allocation2] sm:$0xff] %vm121, %v117
    %123 = vst.msk [vmem:[#allocation2 + $0x8] sm:$0xff] %vm121, %v118
    %124 = vst.msk [vmem:[#allocation2 + $0x10] sm:$0xff] %vm121, %v119
    %125 = vst.msk [vmem:[#allocation2 + $0x18] sm:$0xff] %vm121, %v120
    // Predicated region
    $region26: #{tpu_custom_call.1} parent=1 // pred_check
      %p126 = pneg %p48
    $region27: #{tpu_custom_call.1} parent=1 // pred_check_branch
      %128 = sbr.rel (%p126) target = $region29
    $region28: #{tpu_custom_call.1} parent=1 // pred_region
      %v129 = vld [vmem:[#allocation2] sm:$0xff]
      %v130 = vld [vmem:[#allocation2 + $0x8] sm:$0xff]
      %v131 = vld [vmem:[#allocation2 + $0x10] sm:$0xff]
      %v132 = vld [vmem:[#allocation2 + $0x18] sm:$0xff]
      %v133 = vld [vmem:[%s2] sm:$0x1]
      %v135 = vperm.slane %v133, 0
      %v137 = vadd.f32 %v129, %v135
      %v138 = vadd.f32 %v130, %v135
      %v139 = vadd.f32 %v131, %v135
      %v140 = vadd.f32 %v132, %v135
      %v141 = vpack.c.bf16 %v137, %v137
      %v142 = vpack.c.bf16 %v138, %v138
      %v143 = vpack.c.bf16 %v139, %v139
      %v144 = vpack.c.bf16 %v140, %v140
      %vm145 = vcmask 781312
      %146 = vst.msk [vmem:[#allocation8] sm:$0xf] %vm145, %v141
      %147 = vst.msk [vmem:[#allocation8 + $0x4] sm:$0xf] %vm145, %v142
      %148 = vst.msk [vmem:[#allocation8 + $0x8] sm:$0xf] %vm145, %v143
      %149 = vst.msk [vmem:[#allocation8 + $0xc] sm:$0xf] %vm145, %v144
    $region29: #{tpu_custom_call.1} parent=1 // pred_fallthru
      _
    // Predicated region
    $region30: #{tpu_custom_call.1} parent=1 // pred_check
      _
    $region31: #{tpu_custom_call.1} parent=1 // pred_check_branch
      %151 = sbr.rel (0) target = $region33
    $region32: #{tpu_custom_call.1} parent=1 // pred_region
      %153 = vsyncadd [#allocation5], 0
      %s154 = sshll.u32 [#allocation8], 4
      %s155 = int_to_ptr.vmem [resolvable:$true] %s154
      %s156 = sshll.u32 %s3, 4
      %s157 = int_to_ptr.hbm [resolvable:$true] %s156
      %162 = dma.vmem_to_hbm [thread:$0]  %s155, 256, %s157, [#allocation5], 64, 64, 4
    $region33: #{tpu_custom_call.1} parent=1 // pred_fallthru
      _
    // Predicated region
    $region34: #{tpu_custom_call.1} parent=1 // pred_check
      _
    $region35: #{tpu_custom_call.1} parent=1 // pred_check_branch
      %164 = sbr.rel (0) target = $region37
    $region36: #{tpu_custom_call.1} parent=1 // pred_region
      %166 = dma.done [#allocation5], 256
    $region37: #{tpu_custom_call.1} parent=1 // pred_fallthru
      _
    %167 = vsyncpa [#allocation4], 1
    %168 = vsyncpa [#allocation7], 1
    %169 = vsyncpa [#allocation5], 1

</llo_original>
